<compile_context>
chip_gen: v5e
topology: v5e:2x2
jax: 0.10.0
libtpu: 0.0.40
codegen_flags: <defaults>
</compile_context>

<pallas_src>
import math

import jax
import jax.numpy as jnp
import numpy as np
from jax.experimental import pallas as pl
from jax.experimental.pallas import tpu as pltpu


def _matmul_kernel(x_ref, w_ref, o_ref):
    # x_ref: (tm, K), w_ref: (K, tn).  K (= n_latent) is small and kept whole,
    # so no accumulator / reduction grid axis is needed: one MXU matmul per grid
    # step with f32 accumulation, then a lane-dense store in the output dtype.
    o_ref[...] = jnp.dot(
        x_ref[...], w_ref[...], preferred_element_type=jnp.float32
    ).astype(o_ref.dtype)


def _pick_tile(dim, target):
    # Full-extent block when the dim is small (always a legal block shape);
    # otherwise a fixed (8,128)-aligned tile.  Trailing partial blocks are
    # masked by Pallas, and since K is un-tiled no garbage contaminates valid
    # output elements.
    return dim if dim <= target else target


def _tiled_matmul(x, w, *, tm_target=512, tn_target=2048, out_dtype=None):
    """x: (M, K) @ w: (K, N) -> (M, N). 2-D fully parallel grid, K kept whole."""
    M, K = x.shape
    K2, N = w.shape
    assert K == K2
    if out_dtype is None:
        out_dtype = x.dtype

    tm = _pick_tile(M, tm_target)
    tn = _pick_tile(N, tn_target)
    if M <= tm and N == tn and N >= 256:
        # M collapsed to a single block: split the lane axis into >=2 blocks so
        # both v7x TensorCores get grid work (bandwidth-bound kernel).
        tn = pl.cdiv(pl.cdiv(N, 2), 128) * 128
    grid = (pl.cdiv(M, tm), pl.cdiv(N, tn))

    bytes_accessed = (
        jnp.dtype(x.dtype).itemsize * M * K
        + jnp.dtype(w.dtype).itemsize * K * N
        + jnp.dtype(out_dtype).itemsize * M * N
    )
    cost = pl.CostEstimate(
        flops=2 * M * K * N, transcendentals=0, bytes_accessed=bytes_accessed
    )

    return pl.pallas_call(
        _matmul_kernel,
        out_shape=jax.ShapeDtypeStruct((M, N), out_dtype),
        grid_spec=pltpu.PrefetchScalarGridSpec(
            num_scalar_prefetch=0,
            grid=grid,
            in_specs=[
                pl.BlockSpec((tm, K), lambda i, j: (i, 0)),   # latent tile (resident over j)
                pl.BlockSpec((K, tn), lambda i, j: (0, j)),   # weight tile, N on the lane axis
            ],
            out_specs=pl.BlockSpec((tm, tn), lambda i, j: (i, j)),
        ),
        compiler_params=pltpu.CompilerParams(
            dimension_semantics=("parallel", "parallel"),
        ),
        cost_estimate=cost,
    )(x, w)


def prepare_decoder_params(delta_height_weight, delta_baseline_weight,
                           dtype=jnp.bfloat16):
    """One-time (per parameter update) conversion to the kernel-friendly layout.

    delta_height_weight : (n_genes, n_latent, n_out) -> (n_latent, n_genes, n_out) bf16
    delta_baseline_weight: (n_genes, n_latent)        -> (n_latent, n_genes)       bf16

    Done once, outside the per-call path, so the forward pass never pays an HBM
    transpose over the weight tables.
    """
    w_h_t = jnp.transpose(delta_height_weight, (1, 0, 2)).astype(dtype)
    w_b_t = jnp.transpose(delta_baseline_weight).astype(dtype)
    return w_h_t, w_b_t


def decoder_forward(latent, genes_oi, w_h_t, w_b_t):
    """latent: (n_cells, n_latent) f32/bf16, genes_oi: (n_genes_oi,) int32,
    w_h_t: (n_latent, n_genes, n_out) bf16, w_b_t: (n_latent, n_genes) bf16."""
    n_cells = latent.shape[0]
    n_latent, n_genes, n_out = w_h_t.shape
    n_genes_oi = genes_oi.shape[0]

    compute_dtype = w_b_t.dtype
    latent_c = latent.astype(compute_dtype)

    # ---- delta_height -------------------------------------------------------
    # Gather the selected genes along the middle axis (cheap XLA gather, no
    # transpose needed thanks to the persistent (L, G, O) layout), flatten the
    # (gene, output-component) axes onto the lane axis (free, row-major), and
    # zero-pad the lane width to a multiple of 128 so the output slab is stored
    # with unmasked lane-dense vst.
    w_h = jnp.take(w_h_t, genes_oi, axis=1).reshape(n_latent, n_genes_oi * n_out)
    width = n_genes_oi * n_out
    pad = (-width) % 128
    if pad:
        w_h = jnp.pad(w_h, ((0, 0), (0, pad)))
    height_flat = _tiled_matmul(latent_c, w_h, tm_target=512, tn_target=2048,
                                out_dtype=compute_dtype)
    delta_height = height_flat[:, :width].reshape(n_cells, n_genes_oi, n_out)

    # ---- delta_baseline -----------------------------------------------------
    # Plain latent @ W_b.T with genes on the lane axis; the transpose lives in
    # the persistent parameter layout, not the per-call path.
    delta_baseline = _tiled_matmul(latent_c, w_b_t, tm_target=512,
                                   tn_target=2048, out_dtype=compute_dtype)

    return delta_height, delta_baseline


if __name__ == "__main__":
    # small shapes consistent with the module
    n_cells, n_latent, n_genes, n_genes_oi, n_out = 8, 16, 12, 5, 32

    key = jax.random.PRNGKey(0)
    k1, k2, k3 = jax.random.split(key, 3)

    latent = jax.random.normal(k1, (n_cells, n_latent), jnp.float32)

    # The module zero-initialises delta_height_weight; use small deterministic
    # random values instead so the height path is exercised numerically.
    delta_height_weight = 0.01 * jax.random.normal(
        k2, (n_genes, n_latent, n_out), jnp.float32
    )

    stdv = 1.0 / math.sqrt(n_latent)
    delta_baseline_weight = jax.random.uniform(
        k3, (n_genes, n_latent), jnp.float32, minval=-stdv, maxval=stdv
    )

    genes_oi = jnp.array([3, 0, 7, 11, 5], dtype=jnp.int32)

    # one-time parameter prep (layout + bf16), outside the per-call path
    w_h_t, w_b_t = prepare_decoder_params(delta_height_weight, delta_baseline_weight)

    fwd = jax.jit(decoder_forward)
    delta_height, delta_baseline = fwd(latent, genes_oi, w_h_t, w_b_t)
    jax.block_until_ready((delta_height, delta_baseline))

    # Reference built from the same bf16-rounded operands (f32 accumulation),
    # so the only extra error vs the kernel is the final bf16 output cast.
    lat_r = latent.astype(jnp.bfloat16).astype(jnp.float32)
    wh_r = delta_height_weight.astype(jnp.bfloat16).astype(jnp.float32)
    wb_r = delta_baseline_weight.astype(jnp.bfloat16).astype(jnp.float32)
    dh_ref = jnp.einsum("cl,glo->cgo", lat_r, wh_r[genes_oi])
    db_ref = lat_r @ wb_r.T

    assert delta_height.shape == (n_cells, n_genes_oi, n_out)
    assert delta_baseline.shape == (n_cells, n_genes)

    dh_np = np.asarray(delta_height.astype(jnp.float32))
    db_np = np.asarray(delta_baseline.astype(jnp.float32))
    assert np.allclose(dh_np, np.asarray(dh_ref), rtol=2e-2, atol=1e-3)
    assert np.allclose(db_np, np.asarray(db_ref), rtol=2e-2, atol=1e-3)

    print("KERNEL_OK")
</pallas_src>

<mosaic_0001>
module attributes {stable_mosaic.version = 11 : i64} {
  func.func @_matmul_kernel(%arg0: i32, %arg1: i32, %arg2: memref<8x16xbf16, #tpu.memory_space<vmem>>, %arg3: memref<16x128xbf16, #tpu.memory_space<vmem>>, %arg4: memref<8x128xbf16, #tpu.memory_space<vmem>>) attributes {dimension_semantics = [#tpu.dimension_semantics<parallel>, #tpu.dimension_semantics<parallel>], iteration_bounds = array<i64: 1, 2>, scalar_prefetch = 0 : i64, scratch_operands = 0 : i64, tpu.core_type = #tpu.core_type<tc>, window_params = [{transform_indices = @transform_0, window_bounds = array<i64: 8, 16>}, {transform_indices = @transform_1, window_bounds = array<i64: 16, 128>}, {transform_indices = @transform_2, window_bounds = array<i64: 8, 128>}]} {
    %c0 = arith.constant 0 : index
    %c0_0 = arith.constant 0 : index
    %0 = vector.load %arg2[%c0, %c0_0] : memref<8x16xbf16, #tpu.memory_space<vmem>>, vector<8x16xbf16>
    %c0_1 = arith.constant 0 : index
    %c0_2 = arith.constant 0 : index
    %1 = vector.load %arg3[%c0_1, %c0_2] : memref<16x128xbf16, #tpu.memory_space<vmem>>, vector<16x128xbf16>
    %cst = arith.constant dense<0.000000e+00> : vector<8x128xf32>
    %2 = tpu.matmul %0, %1, %cst {dimension_numbers = #tpu.dot_dimension_numbers<[1], [0], [0], [1], [0, 0, 1, 1], [], []>} : vector<8x16xbf16>, vector<16x128xbf16>, vector<8x128xf32> -> vector<8x128xf32>
    %3 = arith.truncf %2 : vector<8x128xf32> to vector<8x128xbf16>
    %c0_3 = arith.constant 0 : index
    %c0_4 = arith.constant 0 : index
    %4 = vector.load %arg4[%c0_3, %c0_4] : memref<8x128xbf16, #tpu.memory_space<vmem>>, vector<8x128xbf16>
    tpu.vector_store %arg4[%c0_3, %c0_4], %3 {strides = array<i32>} : memref<8x128xbf16, #tpu.memory_space<vmem>>, vector<8x128xbf16>,
    return
  }
  func.func @transform_0(%arg0: i32, %arg1: i32) -> (i32, i32) {
    %c0_i32 = arith.constant 0 : i32
    %c0_i32_0 = arith.constant 0 : i32
    return %arg0, %c0_i32 : i32, i32
  }
  func.func @transform_1(%arg0: i32, %arg1: i32) -> (i32, i32) {
    %c0_i32 = arith.constant 0 : i32
    %c0_i32_0 = arith.constant 0 : i32
    return %c0_i32, %arg1 : i32, i32
  }
  func.func @transform_2(%arg0: i32, %arg1: i32) -> (i32, i32) {
    %c0_i32 = arith.constant 0 : i32
    return %arg0, %arg1 : i32, i32
  }
}

module attributes {stable_mosaic.version = 11 : i64} {
  func.func @_matmul_kernel(%arg0: i32, %arg1: i32, %arg2: memref<8x16xbf16, #tpu.memory_space<vmem>>, %arg3: memref<16x12xbf16, #tpu.memory_space<vmem>>, %arg4: memref<8x12xbf16, #tpu.memory_space<vmem>>) attributes {dimension_semantics = [#tpu.dimension_semantics<parallel>, #tpu.dimension_semantics<parallel>], iteration_bounds = array<i64: 1, 1>, scalar_prefetch = 0 : i64, scratch_operands = 0 : i64, tpu.core_type = #tpu.core_type<tc>, window_params = [{transform_indices = @transform_0, window_bounds = array<i64: 8, 16>}, {transform_indices = @transform_1, window_bounds = array<i64: 16, 12>}, {transform_indices = @transform_2, window_bounds = array<i64: 8, 12>}]} {
    %c0 = arith.constant 0 : index
    %c0_0 = arith.constant 0 : index
    %0 = vector.load %arg2[%c0, %c0_0] : memref<8x16xbf16, #tpu.memory_space<vmem>>, vector<8x16xbf16>
    %c0_1 = arith.constant 0 : index
    %c0_2 = arith.constant 0 : index
    %1 = vector.load %arg3[%c0_1, %c0_2] : memref<16x12xbf16, #tpu.memory_space<vmem>>, vector<16x12xbf16>
    %cst = arith.constant dense<0.000000e+00> : vector<8x12xf32>
    %2 = tpu.matmul %0, %1, %cst {dimension_numbers = #tpu.dot_dimension_numbers<[1], [0], [0], [1], [0, 0, 1, 1], [], []>} : vector<8x16xbf16>, vector<16x12xbf16>, vector<8x12xf32> -> vector<8x12xf32>
    %3 = arith.truncf %2 : vector<8x12xf32> to vector<8x12xbf16>
    %c0_3 = arith.constant 0 : index
    %c0_4 = arith.constant 0 : index
    %4 = vector.load %arg4[%c0_3, %c0_4] : memref<8x12xbf16, #tpu.memory_space<vmem>>, vector<8x12xbf16>
    tpu.vector_store %arg4[%c0_3, %c0_4], %3 {strides = array<i32>} : memref<8x12xbf16, #tpu.memory_space<vmem>>, vector<8x12xbf16>,
    return
  }
  func.func @transform_0(%arg0: i32, %arg1: i32) -> (i32, i32) {
    %c0_i32 = arith.constant 0 : i32
    %c0_i32_0 = arith.constant 0 : i32
    return %arg0, %c0_i32 : i32, i32
  }
  func.func @transform_1(%arg0: i32, %arg1: i32) -> (i32, i32) {
    %c0_i32 = arith.constant 0 : i32
    %c0_i32_0 = arith.constant 0 : i32
    return %c0_i32, %arg1 : i32, i32
  }
  func.func @transform_2(%arg0: i32, %arg1: i32) -> (i32, i32) {
    %c0_i32 = arith.constant 0 : i32
    return %arg0, %arg1 : i32, i32
  }
}

</mosaic_0001>

<llo_original>
// kernel: decoder_forward.3
$region0: #{decoder_forward.3}
  #allocation0 [shape = 'u32[]', space=smem, size = 0x4, offset = 0x4, fixed_abs, tag = 'smem constant byte address 0x4 - core index']
  #allocation1 [shape = 'u32[72,128]{1,0:T(1,128)}', space=vmem, size = 0x9000, scoped, tag = 'internal scratch']
  %s0 = inlined_call_operand.vmem [shape: bf16[8,16], index: 0, kind: input, shape index: {}]
  %s1 = inlined_call_operand.vmem [shape: bf16[16,12], index: 1, kind: input, shape index: {}]
  %s2 = inlined_call_operand.hbm [shape: bf16[8,12], index: 2, kind: output, shape index: {}]
  %s3 = sld [smem:[#allocation0]]
  $region18: #{decoder_forward.3} parent=0
    _
  %s5 = ssub.s32 1, %s3
  %s6 = scalar_select 0, %s5, %s3
  $region1: #{decoder_forward.3} parent=0
    #allocation2 [shape = 'u8[2048]{0}', space=vmem, size = 0x800, scoped, tag = 'output window, operand 0, single buffered']
    #allocation3 [shape = 's32[1]{0}', space=sflag, size = 0x4, scoped, tag = 'scoped memory for decoder_forward.3']
    %7 = vsyncpa [#allocation3], 0
    // Predicated region
    $region2: #{decoder_forward.3} parent=1 // pred_check
      _
    $region3: #{decoder_forward.3} parent=1 // pred_check_branch
      %9 = sbr.rel (0) target = $region5
    $region4: #{decoder_forward.3} parent=1 // pred_region
      _
    $region5: #{decoder_forward.3} parent=1 // pred_fallthru
      _
    // Predicated region
    $region6: #{decoder_forward.3} parent=1 // pred_check
      _
    $region7: #{decoder_forward.3} parent=1 // pred_check_branch
      %11 = sbr.rel (0) target = $region9
    $region8: #{decoder_forward.3} parent=1 // pred_region
      _
    $region9: #{decoder_forward.3} parent=1 // pred_fallthru
      _
    %v13 = vld [vmem:[%s0] sm:$0xf]
    %v14 = vld [vmem:[%s1] sm:$0xf]
    %v15 = vld [vmem:[%s1 + $0x4] sm:$0xf]
    %v18 = vunpack.c.l.b16 %v14
    %v19 = vunpack.c.l.b16 %v15
    %v20 = vpack.c.b16 %v19, %v18
    %vm22 = vcmask 130048
    %v24 = vsel %vm22, %v13, 0
    %26 = vmatpush.bf16.msra.mxu0 0
    %27 = vmatpush.bf16.msra.mxu0 0
    %28 = vmatpush.bf16.msra.mxu0 0
    %29 = vmatpush.bf16.msra.mxu0 0
    %30 = vmatpush.bf16.msra.mxu0 0
    %31 = vmatpush.bf16.msra.mxu0 0
    %32 = vmatpush.bf16.msra.mxu0 0
    %33 = vmatpush.bf16.msra.mxu0 %v20
    %34 = vmatmul.bf16.gmra.mxu0 %v24
    %v35 = vpop.f32.mrf.mxu0
    %v36 = vadd.f32 0.0, %v35
    %v37 = vpop.f32.mrf.mxu0
    %38 = vdwg.mxu0
    %v39 = vpack.c.bf16 %v36, %v36
    %vm40 = vcmask 93184
    %41 = vst.msk [vmem:[#allocation2] sm:$0xf] %vm40, %v39
    // Predicated region
    $region10: #{decoder_forward.3} parent=1 // pred_check
      _
    $region11: #{decoder_forward.3} parent=1 // pred_check_branch
      %43 = sbr.rel (0) target = $region13
    $region12: #{decoder_forward.3} parent=1 // pred_region
      %45 = vsyncadd [#allocation3], 0
      %s47 = sshll.u32 [#allocation2], 4
      %s48 = int_to_ptr.vmem [resolvable:$true] %s47
      %s49 = sshll.u32 %s2, 4
      %s50 = int_to_ptr.hbm [resolvable:$true] %s49
      %52 = dma.vmem_to_hbm [thread:$0]  %s48, 64, %s50, [#allocation3]
    $region13: #{decoder_forward.3} parent=1 // pred_fallthru
      _
    // Predicated region
    $region14: #{decoder_forward.3} parent=1 // pred_check
      _
    $region15: #{decoder_forward.3} parent=1 // pred_check_branch
      %54 = sbr.rel (0) target = $region17
    $region16: #{decoder_forward.3} parent=1 // pred_region
      %56 = dma.done [#allocation3], 64
    $region17: #{decoder_forward.3} parent=1 // pred_fallthru
      _
    %57 = vsyncpa [#allocation3], 1

// kernel: decoder_forward.2
$region0: #{decoder_forward.2}
  #allocation0 [shape = 'u32[]', space=smem, size = 0x4, offset = 0x4, fixed_abs, tag = 'smem constant byte address 0x4 - core index']
  #allocation1 [shape = 'u32[72,128]{1,0:T(1,128)}', space=vmem, size = 0x9000, scoped, tag = 'internal scratch']
  %s0 = inlined_call_operand.vmem [shape: bf16[8,16], index: 0, kind: input, shape index: {}]
  %s1 = inlined_call_operand.vmem [shape: bf16[16,256], index: 1, kind: input, shape index: {}]
  %s2 = inlined_call_operand.vmem [shape: bf16[8,256], index: 2, kind: output, shape index: {}]
  %s3 = sld [smem:[#allocation0]]
  $region82: #{decoder_forward.2} parent=0
    _
  %s5 = ssub.s32 1, %s3
  %s6 = scalar_select 0, %s5, %s3
  $region1: #{decoder_forward.2} parent=0
    #allocation2 [shape = 'u8[8192]{0}', space=vmem, size = 0x2000, scoped, tag = 'input window, operand 1']
    loop: start=0, step=1, limit=4
    $region2: #{decoder_forward.2} parent=1 // loop_pre_header
      _
    $region3: #{decoder_forward.2} parent=1 // loop_header
      %s8 = sphi 0, %s12
      %p9 = scmp.ge.s32.totalorder %s8, 4
      %s15 = sphi 0, %s27
      %s16 = sphi 0, %s23
      %s17 = sphi 0, %s15
      %s18 = sphi 0, %s16
      %s19 = sphi 0, %s17
      %s20 = sphi 0, %s18
      %s30 = sphi 0, %s32
      %s33 = sphi 0, %s30
      %s34 = sphi 0, %s33
      %s50 = sphi 0, %s34
      %s56 = sphi 0, %s58
      %s59 = sphi 0, %s56
      %s60 = sphi 0, %s59
      %s76 = sphi 0, %s60
      %s84 = sphi 0, %s86
      %s87 = sphi 0, %s84
      %s88 = sphi 0, %s87
      %s104 = sphi 0, %s88
    $region4: #{decoder_forward.2} parent=1 // loop_header_branch
      %11 = sbr.rel (%p9) target = $region8
    $region5: #{decoder_forward.2} parent=1 // loop_body
      %s13 = ssub.s32 %s8, 1
      %s14 = ssub.s32 %s8, 2
      %s21 = sadd.s32 1, %s16
      %p22 = scmp.ge.s32.totalorder %s21, 2
      %s23 = scalar_select %p22, 0, %s21
      %s24 = sadd.s32 1, %s15
      %s25 = scalar_select %p22, %s24, %s15
      %p26 = scmp.ge.s32.totalorder %s25, 1
      %s27 = scalar_select %p26, 0, %s25
      %s28 = ssub.s32 %s15, %s27
      %p29 = scmp.eq.s32.totalorder %s28, 0
      %s31 = sadd.s32 %s30, 1
      %s32 = scalar_select %p29, %s30, %s31
      %p35 = pneg %p29
      %p36 = scmp.eq.s32.totalorder %s8, 1
      %p37 = por %p35, %p36
      %p38 = scmp.ne.s32.totalorder %s30, %s33
      %p39 = scmp.eq.s32.totalorder %s8, 0
      %p40 = por %p38, %p39
      %p41 = scmp.ne.s32.totalorder %s30, %s33
      %p42 = scmp.eq.s32.totalorder %s13, 1
      %p43 = por %p41, %p42
      %p44 = scmp.ne.s32.totalorder %s33, %s34
      %p45 = scmp.eq.s32.totalorder %s13, 0
      %p46 = por %p44, %p45
      %p47 = scmp.ne.s32.totalorder %s33, %s34
      %p48 = scmp.eq.s32.totalorder %s14, 1
      %p49 = por %p47, %p48
      %p51 = scmp.ne.s32.totalorder %s34, %s50
      %p52 = scmp.eq.s32.totalorder %s14, 0
      %p53 = por %p51, %p52
      %s54 = ssub.s32 %s16, %s23
      %p55 = scmp.eq.s32.totalorder %s54, 0
      %s57 = sadd.s32 %s56, 1
      %s58 = scalar_select %p55, %s56, %s57
      %p61 = pneg %p55
      %p62 = scmp.eq.s32.totalorder %s8, 1
      %p63 = por %p61, %p62
      %p64 = scmp.ne.s32.totalorder %s56, %s59
      %p65 = scmp.eq.s32.totalorder %s8, 0
      %p66 = por %p64, %p65
      %p67 = scmp.ne.s32.totalorder %s56, %s59
      %p68 = scmp.eq.s32.totalorder %s13, 1
      %p69 = por %p67, %p68
      %p70 = scmp.ne.s32.totalorder %s59, %s60
      %p71 = scmp.eq.s32.totalorder %s13, 0
      %p72 = por %p70, %p71
      %p73 = scmp.ne.s32.totalorder %s59, %s60
      %p74 = scmp.eq.s32.totalorder %s14, 1
      %p75 = por %p73, %p74
      %p77 = scmp.ne.s32.totalorder %s60, %s76
      %p78 = scmp.eq.s32.totalorder %s14, 0
      %p79 = por %p77, %p78
      %s80 = ssub.s32 %s15, %s27
      %s81 = ssub.s32 %s16, %s23
      %s82 = sor.u32 %s80, %s81
      %p83 = scmp.eq.s32.totalorder %s82, 0
      %s85 = sadd.s32 %s84, 1
      %s86 = scalar_select %p83, %s84, %s85
      %p89 = pneg %p83
      %p90 = scmp.eq.s32.totalorder %s8, 1
      %p91 = por %p89, %p90
      %p92 = scmp.ne.s32.totalorder %s84, %s87
      %p93 = scmp.eq.s32.totalorder %s8, 0
      %p94 = por %p92, %p93
      %p95 = scmp.ne.s32.totalorder %s84, %s87
      %p96 = scmp.eq.s32.totalorder %s13, 1
      %p97 = por %p95, %p96
      %p98 = scmp.ne.s32.totalorder %s87, %s88
      %p99 = scmp.eq.s32.totalorder %s13, 0
      %p100 = por %p98, %p99
      %p101 = scmp.ne.s32.totalorder %s87, %s88
      %p102 = scmp.eq.s32.totalorder %s14, 1
      %p103 = por %p101, %p102
      %p105 = scmp.ne.s32.totalorder %s88, %s104
      %p106 = scmp.eq.s32.totalorder %s14, 0
      %p107 = por %p105, %p106
      %p108 = scmp.le.s32.totalorder 1, %s8
      %p109 = scmp.lt.s32.totalorder %s8, 3
      %p110 = pnand %p108, %p109
      %p111 = pneg %p110
      // Predicated region
      $region9: #{decoder_forward.2} parent=5 // pred_check
        _
      $region10: #{decoder_forward.2} parent=5 // pred_check_branch
        %113 = sbr.rel (%p110) target = $region12
      $region11: #{decoder_forward.2} parent=5 // pred_region
        %s114 = ssub.s32 %s8, 1
        // Predicated region
        $region13: #{decoder_forward.2} parent=11 // pred_check
          %p115 = pneg %p46
        $region14: #{decoder_forward.2} parent=11 // pred_check_branch
          %117 = sbr.rel (%p115) target = $region16
        $region15: #{decoder_forward.2} parent=11 // pred_region
          %p118 = scmp.lt.s32.totalorder %s17, 0
          %s119 = scalar_select %p118, %s17, 0
          %s120 = smul.addr %s119, 4
          %s121 = scalar_lea.vmem %s0, %s120
        $region16: #{decoder_forward.2} parent=11 // pred_fallthru
          _
      $region12: #{decoder_forward.2} parent=5 // pred_fallthru
        _
      %p122 = scmp.lt.s32.totalorder %s8, 2
      // Predicated region
      $region17: #{decoder_forward.2} parent=5 // pred_check
        %p123 = pneg %p122
      $region18: #{decoder_forward.2} parent=5 // pred_check_branch
        %125 = sbr.rel (%p123) target = $region20
      $region19: #{decoder_forward.2} parent=5 // pred_region
        // Predicated region
        $region21: #{decoder_forward.2} parent=19 // pred_check
          %p126 = pneg %p66
        $region22: #{decoder_forward.2} parent=19 // pred_check_branch
          %128 = sbr.rel (%p126) target = $region24
        $region23: #{decoder_forward.2} parent=19 // pred_region
          %s129 = sand.u32 %s56, 1
          %s130 = sand.u32 %s56, 1
          %s131 = smul.addr %s130, 8
          %s132 = scalar_lea.vmem [#allocation2], %s131
          %s133 = smul.addr %s16, 4
          %s134 = scalar_lea.vmem %s1, %s133
          // Predicated region
          $region25: #{decoder_forward.2} parent=23 // pred_check
            _
          $region26: #{decoder_forward.2} parent=23 // pred_check_branch
            %136 = sbr.rel (0) target = $region28
          $region27: #{decoder_forward.2} parent=23 // pred_region
            // Predicated region
            $region29: #{decoder_forward.2} parent=27 // pred_check
              _
            $region30: #{decoder_forward.2} parent=27 // pred_check_branch
              %138 = sbr.rel target = $region32
            $region31: #{decoder_forward.2} parent=27 // pred_region
              // Predicated region
              $region44: #{decoder_forward.2} parent=31 // pred_check
                _
              $region45: #{decoder_forward.2} parent=31 // pred_check_branch
                %156 = sbr.rel (0) target = $region47
              $region46: #{decoder_forward.2} parent=31 // pred_region
                loop: start=0, step=1, limit=1
                $region48: #{decoder_forward.2} parent=46 // loop_pre_header
                  _
                $region49: #{decoder_forward.2} parent=46 // loop_header
                  %s158 = sphi 0, %s162
                  %p159 = scmp.ge.s32.totalorder %s158, 1
                  %s163 = sphi %s134, %s134
                  %s164 = sphi %s132, %s132
                $region50: #{decoder_forward.2} parent=46 // loop_header_branch
                  %161 = sbr.rel (%p159) target = $region54
                $region51: #{decoder_forward.2} parent=46 // loop_body
                  _
                $region52: #{decoder_forward.2} parent=46 // loop_footer
                  %s162 = sadd.s32 1, %s158
                $region53: #{decoder_forward.2} parent=46 // loop_footer_branch
                  %157 = sbr.rel target = $region49
                $region54: #{decoder_forward.2} parent=46 // loop_exit
                  _
                %s166 = ssub.s32 16, 1
                loop: start=0, step=1, limit=1
                $region55: #{decoder_forward.2} parent=46 // loop_pre_header
                  _
                $region56: #{decoder_forward.2} parent=46 // loop_header
                  %s168 = sphi 0, %s172
                  %p169 = scmp.ge.s32.totalorder %s168, 1
                  %s173 = sphi %s134, %s134
                  %s174 = sphi %s132, %s132
                $region57: #{decoder_forward.2} parent=46 // loop_header_branch
                  %171 = sbr.rel (%p169) target = $region61
                $region58: #{decoder_forward.2} parent=46 // loop_body
                  %v175 = vld [vmem:[%s173] sm:%s166]
                  %176 = vst [vmem:[%s174] sm:%s166] %v175
                  %v177 = vld [vmem:[%s173 + $0x8] sm:%s166]
                  %178 = vst [vmem:[%s174 + $0x4] sm:%s166] %v177
                $region59: #{decoder_forward.2} parent=46 // loop_footer
                  %s172 = sadd.s32 1, %s168
                $region60: #{decoder_forward.2} parent=46 // loop_footer_branch
                  %167 = sbr.rel target = $region56
                $region61: #{decoder_forward.2} parent=46 // loop_exit
                  _
              $region47: #{decoder_forward.2} parent=31 // pred_fallthru
                _
            $region32: #{decoder_forward.2} parent=27 // pred_fallthru
              _
            // Predicated region
            $region33: #{decoder_forward.2} parent=27 // pred_check
              _
            $region34: #{decoder_forward.2} parent=27 // pred_check_branch
              %140 = sbr.rel (0) target = $region36
            $region35: #{decoder_forward.2} parent=27 // pred_region
              %s142 = ssub.s32 16, 1
              loop: start=0, step=1, limit=1
              $region37: #{decoder_forward.2} parent=35 // loop_pre_header
                _
              $region38: #{decoder_forward.2} parent=35 // loop_header
                %s144 = sphi 0, %s148
                %p145 = scmp.ge.s32.totalorder %s144, 1
                %s149 = sphi %s134, %s134
                %s150 = sphi %s132, %s132
              $region39: #{decoder_forward.2} parent=35 // loop_header_branch
                %147 = sbr.rel (%p145) target = $region43
              $region40: #{decoder_forward.2} parent=35 // loop_body
                %v151 = vld [vmem:[%s149] sm:%s142]
                %152 = vst [vmem:[%s150] sm:%s142] %v151
                %v153 = vld [vmem:[%s149 + $0x8] sm:%s142]
                %154 = vst [vmem:[%s150 + $0x4] sm:%s142] %v153
              $region41: #{decoder_forward.2} parent=35 // loop_footer
                %s148 = sadd.s32 1, %s144
              $region42: #{decoder_forward.2} parent=35 // loop_footer_branch
                %143 = sbr.rel target = $region38
              $region43: #{decoder_forward.2} parent=35 // loop_exit
                _
            $region36: #{decoder_forward.2} parent=27 // pred_fallthru
              _
          $region28: #{decoder_forward.2} parent=23 // pred_fallthru
            _
          %179 = vnop
        $region24: #{decoder_forward.2} parent=19 // pred_fallthru
          _
      $region20: #{decoder_forward.2} parent=5 // pred_fallthru
        _
      %p180 = scmp.le.s32.totalorder 1, %s8
      %p181 = scmp.lt.s32.totalorder %s8, 3
      %p182 = pnand %p180, %p181
      %p183 = pneg %p182
      // Predicated region
      $region62: #{decoder_forward.2} parent=5 // pred_check
        _
      $region63: #{decoder_forward.2} parent=5 // pred_check_branch
        %185 = sbr.rel (%p182) target = $region65
      $region64: #{decoder_forward.2} parent=5 // pred_region
        %s186 = ssub.s32 %s8, 1
        %s187 = sand.u32 %s59, 1
        %s188 = sand.u32 %s59, 1
        %s189 = smul.addr %s188, 8
        %s190 = scalar_lea.vmem [#allocation2], %s189
        // Predicated region
        $region66: #{decoder_forward.2} parent=64 // pred_check
          %p191 = pneg %p72
        $region67: #{decoder_forward.2} parent=64 // pred_check_branch
          %193 = sbr.rel (%p191) target = $region69
        $region68: #{decoder_forward.2} parent=64 // pred_region
          _
        $region69: #{decoder_forward.2} parent=64 // pred_fallthru
          _
        %p194 = scmp.lt.s32.totalorder %s17, 0
        %s195 = scalar_select %p194, %s17, 0
        %s196 = smul.addr %s195, 4
        %s197 = scalar_lea.vmem %s0, %s196
        %p198 = pneg %p46
        %p199 = pneg %p43
        %s200 = sand.u32 %s59, 1
        %s201 = sand.u32 %s59, 1
        %s202 = smul.addr %s201, 8
        %s203 = scalar_lea.vmem [#allocation2], %s202
        %p204 = pneg %p72
        %p205 = pneg %p69
        %p206 = pneg %p100
        %p207 = pneg %p97
        %p208 = scmp.lt.s32.totalorder %s17, 0
        %s209 = scalar_select %p208, %s17, 0
        %p210 = scmp.lt.s32.totalorder %s18, 1
        %s211 = scalar_select %p210, %s18, 1
        %s212 = smul.addr %s209, 2
        %s213 = sadd.s32 %s211, %s212
        %s214 = smul.addr %s213, 4
        %s215 = scalar_lea.vmem %s2, %s214
        %p216 = scmp.lt.s32.totalorder %s17, 0
        %s217 = scalar_select %p216, %s17, 0
        %s218 = smul.addr %s217, 4
        %s219 = scalar_lea.vmem %s0, %s218
        %p220 = scmp.lt.s32.totalorder %s17, 0
        %s221 = scalar_select %p220, %s17, 0
        %p222 = scmp.lt.s32.totalorder %s18, 1
        %s223 = scalar_select %p222, %s18, 1
        %s224 = smul.addr %s221, 2
        %s225 = sadd.s32 %s223, %s224
        %s226 = smul.addr %s225, 4
        %s227 = scalar_lea.vmem %s2, %s226
        %v229 = vld [vmem:[%s219] sm:$0xf]
        %v230 = vld [vmem:[%s190] sm:$0xf]
        %v231 = vld [vmem:[%s190 + $0x4] sm:$0xf]
        %v234 = vunpack.c.l.b16 %v230
        %v235 = vunpack.c.l.b16 %v231
        %v236 = vpack.c.b16 %v235, %v234
        %vm238 = vcmask 130048
        %v240 = vsel %vm238, %v229, 0
        %242 = vmatpush.bf16.msra.mxu0 0
        %243 = vmatpush.bf16.msra.mxu0 0
        %244 = vmatpush.bf16.msra.mxu0 0
        %245 = vmatpush.bf16.msra.mxu0 0
        %246 = vmatpush.bf16.msra.mxu0 0
        %247 = vmatpush.bf16.msra.mxu0 0
        %248 = vmatpush.bf16.msra.mxu0 0
        %249 = vmatpush.bf16.msra.mxu0 %v236
        %250 = vmatmul.bf16.gmra.mxu0 %v240
        %v251 = vpop.f32.mrf.mxu0
        %v252 = vadd.f32 0.0, %v251
        %v253 = vpop.f32.mrf.mxu0
        %254 = vdwg.mxu0
        %v255 = vpack.c.bf16 %v252, %v252
        %256 = vst [vmem:[%s227] sm:$0xf] %v255
        %p257 = scmp.lt.s32.totalorder %s17, 0
        %s258 = scalar_select %p257, %s17, 0
        %p259 = scmp.lt.s32.totalorder %s18, 1
        %s260 = scalar_select %p259, %s18, 1
        %s261 = smul.addr %s258, 2
        %s262 = sadd.s32 %s260, %s261
        %s263 = smul.addr %s262, 4
        %s264 = scalar_lea.vmem %s2, %s263
        // Predicated region
        $region70: #{decoder_forward.2} parent=64 // pred_check
          %p265 = pneg %p97
        $region71: #{decoder_forward.2} parent=64 // pred_check_branch
          %267 = sbr.rel (%p265) target = $region73
        $region72: #{decoder_forward.2} parent=64 // pred_region
          _
        $region73: #{decoder_forward.2} parent=64 // pred_fallthru
          _
      $region65: #{decoder_forward.2} parent=5 // pred_fallthru
        _
      %p268 = scmp.le.s32.totalorder 2, %s8
      // Predicated region
      $region74: #{decoder_forward.2} parent=5 // pred_check
        %p269 = pneg %p268
      $region75: #{decoder_forward.2} parent=5 // pred_check_branch
        %271 = sbr.rel (%p269) target = $region77
      $region76: #{decoder_forward.2} parent=5 // pred_region
        %s272 = ssub.s32 %s8, 2
        // Predicated region
        $region78: #{decoder_forward.2} parent=76 // pred_check
          %p273 = pneg %p103
        $region79: #{decoder_forward.2} parent=76 // pred_check_branch
          %275 = sbr.rel (%p273) target = $region81
        $region80: #{decoder_forward.2} parent=76 // pred_region
          %p276 = scmp.lt.s32.totalorder %s19, 0
          %s277 = scalar_select %p276, %s19, 0
          %p278 = scmp.lt.s32.totalorder %s20, 1
          %s279 = scalar_select %p278, %s20, 1
          %s280 = smul.addr %s277, 2
          %s281 = sadd.s32 %s279, %s280
          %s282 = smul.addr %s281, 4
          %s283 = scalar_lea.vmem %s2, %s282
        $region81: #{decoder_forward.2} parent=76 // pred_fallthru
          _
      $region77: #{decoder_forward.2} parent=5 // pred_fallthru
        _
    $region6: #{decoder_forward.2} parent=1 // loop_footer
      %s12 = sadd.s32 1, %s8
    $region7: #{decoder_forward.2} parent=1 // loop_footer_branch
      %7 = sbr.rel target = $region3
    $region8: #{decoder_forward.2} parent=1 // loop_exit
      _

</llo_original>
